<compile_context>
chip_gen: v6e
topology: v6e:2x2x1
jax: 0.10.0
libtpu: 0.0.40
codegen_flags: <defaults>
</compile_context>

<pallas_src>
import functools

import jax
import jax.numpy as jnp
from jax.experimental import pallas as pl
from jax.experimental.pallas import tpu as pltpu


C_IN = 3
C_STEM = 32
C_HEAD = 128
NUM_OUT = 11 * (33 + 1)      # 374 classifier outputs
K_RAW = 9 * C_IN             # 27 (3x3 patch * C_IN)
K_PAD = 32                   # contraction padded for clean packing/tiling
N_PAD = 384                  # 374 rounded up to a multiple of 128 (lane-dense store)


def _round_up(x, m):
    return (x + m - 1) // m * m


def _silu(y):
    # exp + approximate reciprocal both ride the EUP slot (free next to the MXU
    # epilogue); keeps the VALU slots clear.
    return y * pl.reciprocal(1.0 + jnp.exp(-y), approx=True)


# ---------------------------------------------------------------------------
# Fused Pallas kernel: stem matmul + head matmul + global avg pool + fc
# ---------------------------------------------------------------------------
def _fused_kernel(p_ref, w0_ref, b0_ref, w1_ref, b1_ref, wf_ref, bf_ref,
                  o_ref, acc_ref, *, hw, tm, need_mask):
    j = pl.program_id(1)

    @pl.when(j == 0)
    def _():
        acc_ref[...] = jnp.zeros_like(acc_ref)

    # --- conv_stem (im2col matmul, bf16 on the MXU) + folded bn0 + SiLU ----
    x = p_ref[0]                                                 # (tm, K_PAD) bf16
    h = jnp.dot(x, w0_ref[...], preferred_element_type=jnp.float32)
    h = _silu(h + b0_ref[...])                                   # (tm, C_STEM) f32

    # --- conv_head 1x1 (bf16 MXU) + folded bn1 + SiLU ----------------------
    f = jnp.dot(h.astype(w1_ref.dtype), w1_ref[...],
                preferred_element_type=jnp.float32)
    f = _silu(f + b1_ref[...])                                   # (tm, C_HEAD) f32

    if need_mask:
        # Rows past the true H*W are zero-padded patches; keep them out of the
        # pooled mean.
        row = j * tm + jax.lax.broadcasted_iota(jnp.int32, (tm, 1), 0)
        f = jnp.where(row < hw, f, 0.0)

    # --- AdaptiveAvgPool2d(1): running per-image sum in VMEM scratch -------
    acc_ref[...] += jnp.sum(f, axis=0, keepdims=True)            # (1, C_HEAD)

    @pl.when(j == pl.num_programs(1) - 1)
    def _():
        pooled = acc_ref[...] * (1.0 / hw)                       # mean over H*W
        # Dropout(p=0.5) is identity at inference; go straight to the Linear.
        y = jnp.dot(pooled, wf_ref[...], preferred_element_type=jnp.float32)
        o_ref[...] = (y + bf_ref[...]).reshape(o_ref.shape).astype(o_ref.dtype)


def fused_features_pool_fc(patches, w0, b0, w1, b1, wf, bf):
    """patches: (B, HW, K_PAD) bf16 -> logits (B, N_PAD) f32 (padded)."""
    B, hw, kpad = patches.shape
    c_stem, c_head, n_out = w0.shape[1], w1.shape[1], wf.shape[1]

    tm = min(512, _round_up(hw, 8))          # rows per grid step (multiple of 8)
    hw_pad = _round_up(hw, tm)
    if hw_pad != hw:
        patches = jnp.pad(patches, ((0, 0), (0, hw_pad - hw), (0, 0)))
    n_tiles = hw_pad // tm

    kernel = functools.partial(_fused_kernel, hw=hw, tm=tm,
                               need_mask=(hw_pad != hw))

    flops = int(2 * B * hw_pad * (kpad * c_stem + c_stem * c_head)
                + 2 * B * c_head * n_out)
    transcendentals = int(B * hw_pad * (c_stem + c_head))
    bytes_accessed = int(patches.size * 2                 # bf16 patches
                         + (w0.size + w1.size) * 2        # bf16 weights
                         + (b0.size + b1.size + wf.size + bf.size) * 4
                         + B * n_out * 4)                 # f32 logits out

    out = pl.pallas_call(
        kernel,
        out_shape=jax.ShapeDtypeStruct((B, 1, n_out), jnp.float32),
        grid=(B, n_tiles),
        in_specs=[
            pl.BlockSpec((1, tm, kpad), lambda b, j: (b, j, 0)),     # patches tile
            pl.BlockSpec((kpad, c_stem), lambda b, j: (0, 0)),       # stem weight
            pl.BlockSpec((1, c_stem), lambda b, j: (0, 0)),          # stem bias
            pl.BlockSpec((c_stem, c_head), lambda b, j: (0, 0)),     # head weight
            pl.BlockSpec((1, c_head), lambda b, j: (0, 0)),          # head bias
            pl.BlockSpec((c_head, n_out), lambda b, j: (0, 0)),      # fc weight
            pl.BlockSpec((1, n_out), lambda b, j: (0, 0)),           # fc bias
        ],
        out_specs=pl.BlockSpec((1, 1, n_out), lambda b, j: (b, 0, 0)),
        scratch_shapes=[pltpu.VMEM((1, c_head), jnp.float32)],       # pool accum
        compiler_params=pltpu.CompilerParams(
            dimension_semantics=("parallel", "arbitrary"),
            vmem_limit_bytes=32 * 1024 * 1024),
        cost_estimate=pl.CostEstimate(flops=flops,
                                      transcendentals=transcendentals,
                                      bytes_accessed=bytes_accessed),
    )(patches, w0, b0, w1, b1, wf, bf)
    return out[:, 0, :]


# ---------------------------------------------------------------------------
# Glue (plain JAX): im2col, BN folding, parameter init / packing
# ---------------------------------------------------------------------------
def im2col_3x3_s2_p1(x_nhwc):
    """3x3 patches, stride 2, padding 1.  Returns (B, H//2, W//2, 9*C)."""
    B, H, W, C = x_nhwc.shape
    Hout, Wout = H // 2, W // 2
    xp = jnp.pad(x_nhwc, ((0, 0), (1, 1), (1, 1), (0, 0)))
    cols = []
    for dh in range(3):
        for dw in range(3):
            cols.append(xp[:, dh:dh + 2 * Hout:2, dw:dw + 2 * Wout:2, :])
    return jnp.concatenate(cols, axis=-1)


def fold_bn(w, gamma, beta, mean, var, eps=1e-3):
    """Fold BatchNorm (inference) into the preceding conv's weight/bias."""
    scale = gamma / jnp.sqrt(var + eps)
    return w * scale[None, :], beta - mean * scale


def init_params(key, c_in=C_IN, c_stem=C_STEM, c_head=C_HEAD, num_out=NUM_OUT):
    ks = jax.random.split(key, 8)
    p = {}
    p["stem_w"] = 0.1 * jax.random.normal(ks[0], (9 * c_in, c_stem), jnp.float32)
    p["bn0_gamma"] = 1.0 + 0.01 * jax.random.normal(ks[1], (c_stem,), jnp.float32)
    p["bn0_beta"] = 0.01 * jax.random.normal(ks[2], (c_stem,), jnp.float32)
    p["bn0_mean"] = jnp.zeros((c_stem,), jnp.float32)
    p["bn0_var"] = jnp.ones((c_stem,), jnp.float32)
    p["head_w"] = 0.1 * jax.random.normal(ks[3], (c_stem, c_head), jnp.float32)
    p["bn1_gamma"] = 1.0 + 0.01 * jax.random.normal(ks[4], (c_head,), jnp.float32)
    p["bn1_beta"] = 0.01 * jax.random.normal(ks[5], (c_head,), jnp.float32)
    p["bn1_mean"] = jnp.zeros((c_head,), jnp.float32)
    p["bn1_var"] = jnp.ones((c_head,), jnp.float32)
    p["fc_w"] = 0.05 * jax.random.normal(ks[6], (c_head, num_out), jnp.float32)
    p["fc_b"] = 0.01 * jax.random.normal(ks[7], (num_out,), jnp.float32)
    return p


def prepare_params(p):
    """One-time: fold BN, zero-pad to lane-dense shapes, cast MXU operands to bf16."""
    w0, b0 = fold_bn(p["stem_w"], p["bn0_gamma"], p["bn0_beta"],
                     p["bn0_mean"], p["bn0_var"])
    w1, b1 = fold_bn(p["head_w"], p["bn1_gamma"], p["bn1_beta"],
                     p["bn1_mean"], p["bn1_var"])
    packed = {
        "w0": jnp.pad(w0, ((0, K_PAD - K_RAW), (0, 0))).astype(jnp.bfloat16),
        "b0": b0.reshape(1, C_STEM).astype(jnp.float32),
        "w1": w1.astype(jnp.bfloat16),
        "b1": b1.reshape(1, C_HEAD).astype(jnp.float32),
        "wf": jnp.pad(p["fc_w"], ((0, 0), (0, N_PAD - NUM_OUT))).astype(jnp.float32),
        "bf": jnp.pad(p["fc_b"], (0, N_PAD - NUM_OUT)).reshape(1, N_PAD).astype(jnp.float32),
    }
    return packed


def mango_net_forward(packed, x_nchw):
    """MangoNet.forward.  Input NCHW (PyTorch convention), output (B, 34, 11)."""
    x = jnp.transpose(x_nchw, (0, 2, 3, 1)).astype(jnp.bfloat16)   # NCHW -> NHWC, bf16
    patches = im2col_3x3_s2_p1(x)                                  # (B, H/2, W/2, 27)
    B, Ho, Wo, K = patches.shape
    patches = patches.reshape(B, Ho * Wo, K)
    patches = jnp.pad(patches, ((0, 0), (0, 0), (0, K_PAD - K)))   # K -> 32

    logits = fused_features_pool_fc(patches, packed["w0"], packed["b0"],
                                    packed["w1"], packed["b1"],
                                    packed["wf"], packed["bf"])    # (B, 384)
    return logits[:, :NUM_OUT].reshape(-1, 34, 11)


def _reference_forward(packed, x_nchw):
    """Pure-JAX reference (same bf16 rounding points) for a sanity check."""
    x = jnp.transpose(x_nchw, (0, 2, 3, 1)).astype(jnp.bfloat16)
    patches = im2col_3x3_s2_p1(x).astype(jnp.float32)
    B, Ho, Wo, K = patches.shape
    p = jnp.pad(patches.reshape(B * Ho * Wo, K), ((0, 0), (0, K_PAD - K)))
    h = p @ packed["w0"].astype(jnp.float32) + packed["b0"]
    h = h * jax.nn.sigmoid(h)
    f = h.astype(jnp.bfloat16).astype(jnp.float32) @ packed["w1"].astype(jnp.float32)
    f = f + packed["b1"]
    f = f * jax.nn.sigmoid(f)
    pooled = f.reshape(B, Ho * Wo, C_HEAD).mean(axis=1)
    y = pooled @ packed["wf"] + packed["bf"]
    return y[:, :NUM_OUT].reshape(-1, 34, 11)


if __name__ == "__main__":
    key = jax.random.PRNGKey(0)
    k_param, k_x = jax.random.split(key)

    # Small shapes consistent with the module: batch=2, RGB input, 16x16 spatial.
    x = jax.random.normal(k_x, (2, C_IN, 16, 16), jnp.float32)     # NCHW, PyTorch-style
    params = init_params(k_param)
    packed = prepare_params(params)                                # fold/pad/cast once

    out = mango_net_forward(packed, x)
    out = jax.block_until_ready(out)
    assert out.shape == (2, 34, 11), out.shape

    ref = jax.block_until_ready(_reference_forward(packed, x))
    assert bool(jnp.all(jnp.isfinite(out)))
    assert bool(jnp.allclose(out, ref, rtol=3e-2, atol=3e-2))

    print("KERNEL_OK")
</pallas_src>

<mosaic_0001>
module attributes {stable_mosaic.version = 11 : i64} {
  func.func @_fused_kernel(%arg0: i32, %arg1: i32, %arg2: memref<1x64x32xbf16, #tpu.memory_space<vmem>>, %arg3: memref<32x32xbf16, #tpu.memory_space<vmem>>, %arg4: memref<1x32xf32, #tpu.memory_space<vmem>>, %arg5: memref<32x128xbf16, #tpu.memory_space<vmem>>, %arg6: memref<1x128xf32, #tpu.memory_space<vmem>>, %arg7: memref<128x384xf32, #tpu.memory_space<vmem>>, %arg8: memref<1x384xf32, #tpu.memory_space<vmem>>, %arg9: memref<1x1x384xf32, #tpu.memory_space<vmem>>, %arg10: memref<1x128xf32, #tpu.memory_space<vmem>>) attributes {dimension_semantics = [#tpu.dimension_semantics<parallel>, #tpu.dimension_semantics<arbitrary>], iteration_bounds = array<i64: 2, 1>, scalar_prefetch = 0 : i64, scratch_operands = 1 : i64, tpu.core_type = #tpu.core_type<tc>, window_params = [{transform_indices = @transform_0, window_bounds = array<i64: 1, 64, 32>}, {pipeline_mode = #tpu.pipeline_mode<synchronous>, transform_indices = @transform_1, window_bounds = array<i64: 32, 32>}, {pipeline_mode = #tpu.pipeline_mode<synchronous>, transform_indices = @transform_2, window_bounds = array<i64: 1, 32>}, {pipeline_mode = #tpu.pipeline_mode<synchronous>, transform_indices = @transform_3, window_bounds = array<i64: 32, 128>}, {pipeline_mode = #tpu.pipeline_mode<synchronous>, transform_indices = @transform_4, window_bounds = array<i64: 1, 128>}, {pipeline_mode = #tpu.pipeline_mode<synchronous>, transform_indices = @transform_5, window_bounds = array<i64: 128, 384>}, {pipeline_mode = #tpu.pipeline_mode<synchronous>, transform_indices = @transform_6, window_bounds = array<i64: 1, 384>}, {transform_indices = @transform_7, window_bounds = array<i64: 1, 1, 384>}]} {
    %c0_i32 = arith.constant 0 : i32
    %0 = arith.cmpi eq, %arg1, %c0_i32 : i32
    %1 = arith.extui %0 : i1 to i32
    %c0_i32_0 = arith.constant 0 : i32
    %2 = arith.cmpi ne, %1, %c0_i32_0 : i32
    scf.if %2 {
      %cst_23 = arith.constant 0.000000e+00 : f32
      %38 = vector.broadcast %cst_23 : f32 to vector<1x128xf32>
      %c0_24 = arith.constant 0 : index
      %c0_25 = arith.constant 0 : index
      %39 = vector.load %arg10[%c0_24, %c0_25] : memref<1x128xf32, #tpu.memory_space<vmem>>, vector<1x128xf32>
      tpu.vector_store %arg10[%c0_24, %c0_25], %38 {strides = array<i32>} : memref<1x128xf32, #tpu.memory_space<vmem>>, vector<1x128xf32>,
    } else {
    }
    %c0 = arith.constant 0 : index
    %c0_1 = arith.constant 0 : index
    %c0_2 = arith.constant 0 : index
    %3 = vector.load %arg2[%c0, %c0_1, %c0_2] : memref<1x64x32xbf16, #tpu.memory_space<vmem>>, vector<1x64x32xbf16>
    %4 = vector.shape_cast %3 : vector<1x64x32xbf16> to vector<64x32xbf16>
    %c0_3 = arith.constant 0 : index
    %c0_4 = arith.constant 0 : index
    %5 = vector.load %arg3[%c0_3, %c0_4] : memref<32x32xbf16, #tpu.memory_space<vmem>>, vector<32x32xbf16>
    %cst = arith.constant dense<0.000000e+00> : vector<64x32xf32>
    %6 = tpu.matmul %4, %5, %cst {dimension_numbers = #tpu.dot_dimension_numbers<[1], [0], [0], [1], [0, 0, 1, 1], [], []>} : vector<64x32xbf16>, vector<32x32xbf16>, vector<64x32xf32> -> vector<64x32xf32>
    %c0_5 = arith.constant 0 : index
    %c0_6 = arith.constant 0 : index
    %7 = vector.load %arg4[%c0_5, %c0_6] : memref<1x32xf32, #tpu.memory_space<vmem>>, vector<1x32xf32>
    %8 = vector.broadcast %7 : vector<1x32xf32> to vector<64x32xf32>
    %9 = arith.addf %6, %8 : vector<64x32xf32>
    %cst_7 = arith.constant 0.000000e+00 : f32
    %10 = vector.broadcast %cst_7 : f32 to vector<64x32xf32>
    %11 = arith.subf %10, %9 : vector<64x32xf32>
    %12 = math.exp %11 : vector<64x32xf32>
    %cst_8 = arith.constant 1.000000e+00 : f32
    %13 = vector.broadcast %cst_8 : f32 to vector<64x32xf32>
    %14 = arith.addf %13, %12 : vector<64x32xf32>
    %15 = tpu.reciprocal %14 {approx = true} : vector<64x32xf32> -> vector<64x32xf32>
    %16 = arith.mulf %9, %15 : vector<64x32xf32>
    %17 = arith.truncf %16 : vector<64x32xf32> to vector<64x32xbf16>
    %c0_9 = arith.constant 0 : index
    %c0_10 = arith.constant 0 : index
    %18 = vector.load %arg5[%c0_9, %c0_10] : memref<32x128xbf16, #tpu.memory_space<vmem>>, vector<32x128xbf16>
    %cst_11 = arith.constant dense<0.000000e+00> : vector<64x128xf32>
    %19 = tpu.matmul %17, %18, %cst_11 {dimension_numbers = #tpu.dot_dimension_numbers<[1], [0], [0], [1], [0, 0, 1, 1], [], []>} : vector<64x32xbf16>, vector<32x128xbf16>, vector<64x128xf32> -> vector<64x128xf32>
    %c0_12 = arith.constant 0 : index
    %c0_13 = arith.constant 0 : index
    %20 = vector.load %arg6[%c0_12, %c0_13] : memref<1x128xf32, #tpu.memory_space<vmem>>, vector<1x128xf32>
    %21 = vector.broadcast %20 : vector<1x128xf32> to vector<64x128xf32>
    %22 = arith.addf %19, %21 : vector<64x128xf32>
    %cst_14 = arith.constant 0.000000e+00 : f32
    %23 = vector.broadcast %cst_14 : f32 to vector<64x128xf32>
    %24 = arith.subf %23, %22 : vector<64x128xf32>
    %25 = math.exp %24 : vector<64x128xf32>
    %cst_15 = arith.constant 1.000000e+00 : f32
    %26 = vector.broadcast %cst_15 : f32 to vector<64x128xf32>
    %27 = arith.addf %26, %25 : vector<64x128xf32>
    %28 = tpu.reciprocal %27 {approx = true} : vector<64x128xf32> -> vector<64x128xf32>
    %29 = arith.mulf %22, %28 : vector<64x128xf32>
    %c0_16 = arith.constant 0 : index
    %c0_17 = arith.constant 0 : index
    %30 = vector.load %arg10[%c0_16, %c0_17] : memref<1x128xf32, #tpu.memory_space<vmem>>, vector<1x128xf32>
    %cst_18 = arith.constant dense<0.000000e+00> : vector<128xf32>
    %31 = vector.multi_reduction <add>, %29, %cst_18 [0] : vector<64x128xf32> to vector<128xf32>
    %32 = vector.shape_cast %31 : vector<128xf32> to vector<1x128xf32>
    %33 = arith.addf %30, %32 : vector<1x128xf32>
    %c0_19 = arith.constant 0 : index
    %c0_20 = arith.constant 0 : index
    %34 = vector.load %arg10[%c0_19, %c0_20] : memref<1x128xf32, #tpu.memory_space<vmem>>, vector<1x128xf32>
    tpu.vector_store %arg10[%c0_19, %c0_20], %33 {strides = array<i32>} : memref<1x128xf32, #tpu.memory_space<vmem>>, vector<1x128xf32>,
    %c0_i32_21 = arith.constant 0 : i32
    %35 = arith.cmpi eq, %arg1, %c0_i32_21 : i32
    %36 = arith.extui %35 : i1 to i32
    %c0_i32_22 = arith.constant 0 : i32
    %37 = arith.cmpi ne, %36, %c0_i32_22 : i32
    scf.if %37 {
      %c0_23 = arith.constant 0 : index
      %c0_24 = arith.constant 0 : index
      %38 = vector.load %arg10[%c0_23, %c0_24] : memref<1x128xf32, #tpu.memory_space<vmem>>, vector<1x128xf32>
      %cst_25 = arith.constant 1.562500e-02 : f32
      %39 = vector.broadcast %cst_25 : f32 to vector<1x128xf32>
      %40 = arith.mulf %38, %39 : vector<1x128xf32>
      %c0_26 = arith.constant 0 : index
      %c0_27 = arith.constant 0 : index
      %41 = vector.load %arg7[%c0_26, %c0_27] : memref<128x384xf32, #tpu.memory_space<vmem>>, vector<128x384xf32>
      %cst_28 = arith.constant dense<0.000000e+00> : vector<1x384xf32>
      %42 = tpu.matmul %40, %41, %cst_28 {dimension_numbers = #tpu.dot_dimension_numbers<[1], [0], [0], [1], [0, 0, 1, 1], [], []>} : vector<1x128xf32>, vector<128x384xf32>, vector<1x384xf32> -> vector<1x384xf32>
      %c0_29 = arith.constant 0 : index
      %c0_30 = arith.constant 0 : index
      %43 = vector.load %arg8[%c0_29, %c0_30] : memref<1x384xf32, #tpu.memory_space<vmem>>, vector<1x384xf32>
      %44 = arith.addf %42, %43 : vector<1x384xf32>
      %45 = vector.shape_cast %44 : vector<1x384xf32> to vector<1x1x384xf32>
      %c0_31 = arith.constant 0 : index
      %c0_32 = arith.constant 0 : index
      %c0_33 = arith.constant 0 : index
      %46 = vector.load %arg9[%c0_31, %c0_32, %c0_33] : memref<1x1x384xf32, #tpu.memory_space<vmem>>, vector<1x1x384xf32>
      tpu.vector_store %arg9[%c0_31, %c0_32, %c0_33], %45 {strides = array<i32>} : memref<1x1x384xf32, #tpu.memory_space<vmem>>, vector<1x1x384xf32>,
    } else {
    }
    return
  }
  func.func @transform_0(%arg0: i32, %arg1: i32) -> (i32, i32, i32) {
    %c0_i32 = arith.constant 0 : i32
    %c0_i32_0 = arith.constant 0 : i32
    return %arg0, %arg1, %c0_i32 : i32, i32, i32
  }
  func.func @transform_1(%arg0: i32, %arg1: i32) -> (i32, i32) {
    %c0_i32 = arith.constant 0 : i32
    %c0_i32_0 = arith.constant 0 : i32
    %c0_i32_1 = arith.constant 0 : i32
    return %c0_i32, %c0_i32_0 : i32, i32
  }
  func.func @transform_2(%arg0: i32, %arg1: i32) -> (i32, i32) {
    %c0_i32 = arith.constant 0 : i32
    %c0_i32_0 = arith.constant 0 : i32
    %c0_i32_1 = arith.constant 0 : i32
    return %c0_i32, %c0_i32_0 : i32, i32
  }
  func.func @transform_3(%arg0: i32, %arg1: i32) -> (i32, i32) {
    %c0_i32 = arith.constant 0 : i32
    %c0_i32_0 = arith.constant 0 : i32
    %c0_i32_1 = arith.constant 0 : i32
    return %c0_i32, %c0_i32_0 : i32, i32
  }
  func.func @transform_4(%arg0: i32, %arg1: i32) -> (i32, i32) {
    %c0_i32 = arith.constant 0 : i32
    %c0_i32_0 = arith.constant 0 : i32
    %c0_i32_1 = arith.constant 0 : i32
    return %c0_i32, %c0_i32_0 : i32, i32
  }
  func.func @transform_5(%arg0: i32, %arg1: i32) -> (i32, i32) {
    %c0_i32 = arith.constant 0 : i32
    %c0_i32_0 = arith.constant 0 : i32
    %c0_i32_1 = arith.constant 0 : i32
    return %c0_i32, %c0_i32_0 : i32, i32
  }
  func.func @transform_6(%arg0: i32, %arg1: i32) -> (i32, i32) {
    %c0_i32 = arith.constant 0 : i32
    %c0_i32_0 = arith.constant 0 : i32
    %c0_i32_1 = arith.constant 0 : i32
    return %c0_i32, %c0_i32_0 : i32, i32
  }
  func.func @transform_7(%arg0: i32, %arg1: i32) -> (i32, i32, i32) {
    %c0_i32 = arith.constant 0 : i32
    %c0_i32_0 = arith.constant 0 : i32
    %c0_i32_1 = arith.constant 0 : i32
    return %arg0, %c0_i32, %c0_i32_0 : i32, i32, i32
  }
}

</mosaic_0001>

<llo_original>
// kernel: tpu_custom_call.1
$region0: #{tpu_custom_call.1}
  #allocation0 [shape = 'u32[]', space=smem, size = 0x4, offset = 0x4, fixed_abs, tag = 'smem constant byte address 0x4 - core index']
  #allocation1 [shape = 'u32[144,128]{1,0:T(1,128)}', space=vmem, size = 0x12000, scoped, tag = 'internal scratch']
  #allocation2 [shape = 'f32[1,128]{1,0:T(1,128)}', space=vmem, size = 0x200, scoped, tag = 'scratch operand']
  %s0 = inlined_call_operand.vmem [shape: bf16[2,64,32], index: 0, kind: input, shape index: {}]
  %s1 = inlined_call_operand.vmem [shape: bf16[32,32], index: 1, kind: input, shape index: {}]
  %s2 = inlined_call_operand.vmem [shape: f32[1,32], index: 2, kind: input, shape index: {}]
  %s3 = inlined_call_operand.vmem [shape: bf16[32,128], index: 3, kind: input, shape index: {}]
  %s4 = inlined_call_operand.vmem [shape: f32[1,128], index: 4, kind: input, shape index: {}]
  %s5 = inlined_call_operand.hbm [shape: f32[128,384], index: 5, kind: input, shape index: {}]
  %s6 = inlined_call_operand.vmem [shape: f32[1,384], index: 6, kind: input, shape index: {}]
  %s7 = inlined_call_operand.hbm [shape: f32[2,1,384], index: 7, kind: output, shape index: {}]
  %s8 = sld [smem:[#allocation0]]
  $region73: #{tpu_custom_call.1} parent=0
    _
  %s10 = ssub.s32 1, %s8
  %s11 = scalar_select 0, %s10, %s8
  $region1: #{tpu_custom_call.1} parent=0
    #allocation3 [shape = 'u8[196608]{0}', space=vmem, size = 0x30000, scoped, tag = 'input window, operand 5, single buffered']
    #allocation4 [shape = 's32[2]{0}', space=sflag, size = 0x8, scoped, tag = 'scoped memory for tpu_custom_call.1']
    #allocation5 [shape = 's32[2]{0}', space=sflag, size = 0x8, scoped, tag = 'scoped memory for tpu_custom_call.1']
    #allocation6 [shape = 'u8[3072]{0}', space=vmem, size = 0xc00, scoped, tag = 'output window, operand 0']
    %12 = vsyncpa [#allocation4], 0
    %13 = vsyncpa [#allocation5], 0
    %s14 = scalar_lea.sflag [#allocation5], 1
    %15 = vsyncpa %s14, 0
    loop: start=0, step=1, limit=4
    $region2: #{tpu_custom_call.1} parent=1 // loop_pre_header
      _
    $region3: #{tpu_custom_call.1} parent=1 // loop_header
      %s17 = sphi 0, %s21
      %p18 = scmp.ge.s32.totalorder %s17, 4
      %s24 = sphi 0, %s36
      %s25 = sphi 0, %s32
      %s26 = sphi 0, %s24
      %s27 = sphi 0, %s25
      %s28 = sphi 0, %s26
      %s29 = sphi 0, %s27
      %s41 = sphi 0, %s43
      %s44 = sphi 0, %s41
      %s45 = sphi 0, %s44
      %s61 = sphi 0, %s45
      %s65 = sphi 0, %s65
      %s67 = sphi 0, %s65
      %s68 = sphi 0, %s67
      %s82 = sphi 0, %s68
      %s86 = sphi 0, %s86
      %s88 = sphi 0, %s86
      %s89 = sphi 0, %s88
      %s103 = sphi 0, %s89
      %s107 = sphi 0, %s107
      %s109 = sphi 0, %s107
      %s110 = sphi 0, %s109
      %s124 = sphi 0, %s110
      %s128 = sphi 0, %s128
      %s130 = sphi 0, %s128
      %s131 = sphi 0, %s130
      %s145 = sphi 0, %s131
      %s149 = sphi 0, %s149
      %s151 = sphi 0, %s149
      %s152 = sphi 0, %s151
      %s166 = sphi 0, %s152
      %s170 = sphi 0, %s170
      %s172 = sphi 0, %s170
      %s173 = sphi 0, %s172
      %s187 = sphi 0, %s173
      %s193 = sphi 0, %s195
      %s196 = sphi 0, %s193
      %s197 = sphi 0, %s196
      %s213 = sphi 0, %s197
    $region4: #{tpu_custom_call.1} parent=1 // loop_header_branch
      %20 = sbr.rel (%p18) target = $region8
    $region5: #{tpu_custom_call.1} parent=1 // loop_body
      %s22 = ssub.s32 %s17, 1
      %s23 = ssub.s32 %s17, 2
      %s30 = sadd.s32 1, %s25
      %p31 = scmp.ge.s32.totalorder %s30, 1
      %s32 = scalar_select %p31, 0, %s30
      %s33 = sadd.s32 1, %s24
      %s34 = scalar_select %p31, %s33, %s24
      %p35 = scmp.ge.s32.totalorder %s34, 2
      %s36 = scalar_select %p35, 0, %s34
      %s37 = ssub.s32 %s24, %s36
      %s38 = ssub.s32 %s25, %s32
      %s39 = sor.u32 %s37, %s38
      %p40 = scmp.eq.s32.totalorder %s39, 0
      %s42 = sadd.s32 %s41, 1
      %s43 = scalar_select %p40, %s41, %s42
      %p46 = pneg %p40
      %p47 = scmp.eq.s32.totalorder %s17, 1
      %p48 = por %p46, %p47
      %p49 = scmp.ne.s32.totalorder %s41, %s44
      %p50 = scmp.eq.s32.totalorder %s17, 0
      %p51 = por %p49, %p50
      %p52 = scmp.ne.s32.totalorder %s41, %s44
      %p53 = scmp.eq.s32.totalorder %s22, 1
      %p54 = por %p52, %p53
      %p55 = scmp.ne.s32.totalorder %s44, %s45
      %p56 = scmp.eq.s32.totalorder %s22, 0
      %p57 = por %p55, %p56
      %p58 = scmp.ne.s32.totalorder %s44, %s45
      %p59 = scmp.eq.s32.totalorder %s23, 1
      %p60 = por %p58, %p59
      %p62 = scmp.ne.s32.totalorder %s45, %s61
      %p63 = scmp.eq.s32.totalorder %s23, 0
      %p64 = por %p62, %p63
      %s66 = sadd.s32 %s65, 1
      %p69 = scmp.eq.s32.totalorder %s17, 1
      %p70 = scmp.ne.s32.totalorder %s65, %s67
      %p71 = scmp.eq.s32.totalorder %s17, 0
      %p72 = por %p70, %p71
      %p73 = scmp.ne.s32.totalorder %s65, %s67
      %p74 = scmp.eq.s32.totalorder %s22, 1
      %p75 = por %p73, %p74
      %p76 = scmp.ne.s32.totalorder %s67, %s68
      %p77 = scmp.eq.s32.totalorder %s22, 0
      %p78 = por %p76, %p77
      %p79 = scmp.ne.s32.totalorder %s67, %s68
      %p80 = scmp.eq.s32.totalorder %s23, 1
      %p81 = por %p79, %p80
      %p83 = scmp.ne.s32.totalorder %s68, %s82
      %p84 = scmp.eq.s32.totalorder %s23, 0
      %p85 = por %p83, %p84
      %s87 = sadd.s32 %s86, 1
      %p90 = scmp.eq.s32.totalorder %s17, 1
      %p91 = scmp.ne.s32.totalorder %s86, %s88
      %p92 = scmp.eq.s32.totalorder %s17, 0
      %p93 = por %p91, %p92
      %p94 = scmp.ne.s32.totalorder %s86, %s88
      %p95 = scmp.eq.s32.totalorder %s22, 1
      %p96 = por %p94, %p95
      %p97 = scmp.ne.s32.totalorder %s88, %s89
      %p98 = scmp.eq.s32.totalorder %s22, 0
      %p99 = por %p97, %p98
      %p100 = scmp.ne.s32.totalorder %s88, %s89
      %p101 = scmp.eq.s32.totalorder %s23, 1
      %p102 = por %p100, %p101
      %p104 = scmp.ne.s32.totalorder %s89, %s103
      %p105 = scmp.eq.s32.totalorder %s23, 0
      %p106 = por %p104, %p105
      %s108 = sadd.s32 %s107, 1
      %p111 = scmp.eq.s32.totalorder %s17, 1
      %p112 = scmp.ne.s32.totalorder %s107, %s109
      %p113 = scmp.eq.s32.totalorder %s17, 0
      %p114 = por %p112, %p113
      %p115 = scmp.ne.s32.totalorder %s107, %s109
      %p116 = scmp.eq.s32.totalorder %s22, 1
      %p117 = por %p115, %p116
      %p118 = scmp.ne.s32.totalorder %s109, %s110
      %p119 = scmp.eq.s32.totalorder %s22, 0
      %p120 = por %p118, %p119
      %p121 = scmp.ne.s32.totalorder %s109, %s110
      %p122 = scmp.eq.s32.totalorder %s23, 1
      %p123 = por %p121, %p122
      %p125 = scmp.ne.s32.totalorder %s110, %s124
      %p126 = scmp.eq.s32.totalorder %s23, 0
      %p127 = por %p125, %p126
      %s129 = sadd.s32 %s128, 1
      %p132 = scmp.eq.s32.totalorder %s17, 1
      %p133 = scmp.ne.s32.totalorder %s128, %s130
      %p134 = scmp.eq.s32.totalorder %s17, 0
      %p135 = por %p133, %p134
      %p136 = scmp.ne.s32.totalorder %s128, %s130
      %p137 = scmp.eq.s32.totalorder %s22, 1
      %p138 = por %p136, %p137
      %p139 = scmp.ne.s32.totalorder %s130, %s131
      %p140 = scmp.eq.s32.totalorder %s22, 0
      %p141 = por %p139, %p140
      %p142 = scmp.ne.s32.totalorder %s130, %s131
      %p143 = scmp.eq.s32.totalorder %s23, 1
      %p144 = por %p142, %p143
      %p146 = scmp.ne.s32.totalorder %s131, %s145
      %p147 = scmp.eq.s32.totalorder %s23, 0
      %p148 = por %p146, %p147
      %s150 = sadd.s32 %s149, 1
      %p153 = scmp.eq.s32.totalorder %s17, 1
      %p154 = scmp.ne.s32.totalorder %s149, %s151
      %p155 = scmp.eq.s32.totalorder %s17, 0
      %p156 = por %p154, %p155
      %p157 = scmp.ne.s32.totalorder %s149, %s151
      %p158 = scmp.eq.s32.totalorder %s22, 1
      %p159 = por %p157, %p158
      %p160 = scmp.ne.s32.totalorder %s151, %s152
      %p161 = scmp.eq.s32.totalorder %s22, 0
      %p162 = por %p160, %p161
      %p163 = scmp.ne.s32.totalorder %s151, %s152
      %p164 = scmp.eq.s32.totalorder %s23, 1
      %p165 = por %p163, %p164
      %p167 = scmp.ne.s32.totalorder %s152, %s166
      %p168 = scmp.eq.s32.totalorder %s23, 0
      %p169 = por %p167, %p168
      %s171 = sadd.s32 %s170, 1
      %p174 = scmp.eq.s32.totalorder %s17, 1
      %p175 = scmp.ne.s32.totalorder %s170, %s172
      %p176 = scmp.eq.s32.totalorder %s17, 0
      %p177 = por %p175, %p176
      %p178 = scmp.ne.s32.totalorder %s170, %s172
      %p179 = scmp.eq.s32.totalorder %s22, 1
      %p180 = por %p178, %p179
      %p181 = scmp.ne.s32.totalorder %s172, %s173
      %p182 = scmp.eq.s32.totalorder %s22, 0
      %p183 = por %p181, %p182
      %p184 = scmp.ne.s32.totalorder %s172, %s173
      %p185 = scmp.eq.s32.totalorder %s23, 1
      %p186 = por %p184, %p185
      %p188 = scmp.ne.s32.totalorder %s173, %s187
      %p189 = scmp.eq.s32.totalorder %s23, 0
      %p190 = por %p188, %p189
      %s191 = ssub.s32 %s24, %s36
      %p192 = scmp.eq.s32.totalorder %s191, 0
      %s194 = sadd.s32 %s193, 1
      %s195 = scalar_select %p192, %s193, %s194
      %p198 = pneg %p192
      %p199 = scmp.eq.s32.totalorder %s17, 1
      %p200 = por %p198, %p199
      %p201 = scmp.ne.s32.totalorder %s193, %s196
      %p202 = scmp.eq.s32.totalorder %s17, 0
      %p203 = por %p201, %p202
      %p204 = scmp.ne.s32.totalorder %s193, %s196
      %p205 = scmp.eq.s32.totalorder %s22, 1
      %p206 = por %p204, %p205
      %p207 = scmp.ne.s32.totalorder %s196, %s197
      %p208 = scmp.eq.s32.totalorder %s22, 0
      %p209 = por %p207, %p208
      %p210 = scmp.ne.s32.totalorder %s196, %s197
      %p211 = scmp.eq.s32.totalorder %s23, 1
      %p212 = por %p210, %p211
      %p214 = scmp.ne.s32.totalorder %s197, %s213
      %p215 = scmp.eq.s32.totalorder %s23, 0
      %p216 = por %p214, %p215
      %p217 = scmp.le.s32.totalorder 1, %s17
      %p218 = scmp.lt.s32.totalorder %s17, 3
      %p219 = pnand %p217, %p218
      %p220 = pneg %p219
      // Predicated region
      $region9: #{tpu_custom_call.1} parent=5 // pred_check
        _
      $region10: #{tpu_custom_call.1} parent=5 // pred_check_branch
        %222 = sbr.rel (%p219) target = $region12
      $region11: #{tpu_custom_call.1} parent=5 // pred_region
        %s223 = ssub.s32 %s17, 1
        // Predicated region
        $region13: #{tpu_custom_call.1} parent=11 // pred_check
          %p224 = pneg %p78
        $region14: #{tpu_custom_call.1} parent=11 // pred_check_branch
          %226 = sbr.rel (%p224) target = $region16
        $region15: #{tpu_custom_call.1} parent=11 // pred_region
          _
        $region16: #{tpu_custom_call.1} parent=11 // pred_fallthru
          _
        // Predicated region
        $region17: #{tpu_custom_call.1} parent=11 // pred_check
          %p227 = pneg %p99
        $region18: #{tpu_custom_call.1} parent=11 // pred_check_branch
          %229 = sbr.rel (%p227) target = $region20
        $region19: #{tpu_custom_call.1} parent=11 // pred_region
          _
        $region20: #{tpu_custom_call.1} parent=11 // pred_fallthru
          _
        // Predicated region
        $region21: #{tpu_custom_call.1} parent=11 // pred_check
          %p230 = pneg %p120
        $region22: #{tpu_custom_call.1} parent=11 // pred_check_branch
          %232 = sbr.rel (%p230) target = $region24
        $region23: #{tpu_custom_call.1} parent=11 // pred_region
          _
        $region24: #{tpu_custom_call.1} parent=11 // pred_fallthru
          _
        // Predicated region
        $region25: #{tpu_custom_call.1} parent=11 // pred_check
          %p233 = pneg %p141
        $region26: #{tpu_custom_call.1} parent=11 // pred_check_branch
          %235 = sbr.rel (%p233) target = $region28
        $region27: #{tpu_custom_call.1} parent=11 // pred_region
          _
        $region28: #{tpu_custom_call.1} parent=11 // pred_fallthru
          _
        // Predicated region
        $region29: #{tpu_custom_call.1} parent=11 // pred_check
          %p236 = pneg %p162
        $region30: #{tpu_custom_call.1} parent=11 // pred_check_branch
          %238 = sbr.rel (%p236) target = $region32
        $region31: #{tpu_custom_call.1} parent=11 // pred_region
          %s240 = ssub.s32 6144, 6144
          %241 = vsyncadd [#allocation4], %s240
          %s242 = sshll.u32 [#allocation3], 4
          %s243 = int_to_ptr.vmem [resolvable:$true] %s242
          %248 = dma.hbm_to_vmem [thread:$0]  %s5, 6144, %s243, [#allocation4], 384, 384, 24
        $region32: #{tpu_custom_call.1} parent=11 // pred_fallthru
          _
        // Predicated region
        $region33: #{tpu_custom_call.1} parent=11 // pred_check
          %p249 = pneg %p183
        $region34: #{tpu_custom_call.1} parent=11 // pred_check_branch
          %251 = sbr.rel (%p249) target = $region36
        $region35: #{tpu_custom_call.1} parent=11 // pred_region
          _
        $region36: #{tpu_custom_call.1} parent=11 // pred_fallthru
          _
      $region12: #{tpu_custom_call.1} parent=5 // pred_fallthru
        _
      %p252 = scmp.lt.s32.totalorder %s17, 2
      // Predicated region
      $region37: #{tpu_custom_call.1} parent=5 // pred_check
        %p253 = pneg %p252
      $region38: #{tpu_custom_call.1} parent=5 // pred_check_branch
        %255 = sbr.rel (%p253) target = $region40
      $region39: #{tpu_custom_call.1} parent=5 // pred_region
        // Predicated region
        $region41: #{tpu_custom_call.1} parent=39 // pred_check
          %p256 = pneg %p51
        $region42: #{tpu_custom_call.1} parent=39 // pred_check_branch
          %258 = sbr.rel (%p256) target = $region44
        $region43: #{tpu_custom_call.1} parent=39 // pred_region
          %s259 = smul.u32 8, %s25
          %p260 = scmp.lt.s32.totalorder %s24, 1
          %s261 = scalar_select %p260, %s24, 1
          %p262 = scmp.lt.s32.totalorder %s259, 7
          %s263 = scalar_select %p262, %s259, 7
          %s264 = smul.addr %s261, 8
          %s265 = sadd.s32 %s263, %s264
          %s266 = smul.addr %s265, 4
          %s267 = scalar_lea.vmem %s0, %s266
          %s268 = smul.u32 8, %s25
        $region44: #{tpu_custom_call.1} parent=39 // pred_fallthru
          _
      $region40: #{tpu_custom_call.1} parent=5 // pred_fallthru
        _
      %p269 = scmp.le.s32.totalorder 1, %s17
      %p270 = scmp.lt.s32.totalorder %s17, 3
      %p271 = pnand %p269, %p270
      %p272 = pneg %p271
      // Predicated region
      $region45: #{tpu_custom_call.1} parent=5 // pred_check
        _
      $region46: #{tpu_custom_call.1} parent=5 // pred_check_branch
        %274 = sbr.rel (%p271) target = $region48
      $region47: #{tpu_custom_call.1} parent=5 // pred_region
        %s275 = ssub.s32 %s17, 1
        // Predicated region
        $region49: #{tpu_custom_call.1} parent=47 // pred_check
          %p276 = pneg %p162
        $region50: #{tpu_custom_call.1} parent=47 // pred_check_branch
          %278 = sbr.rel (%p276) target = $region52
        $region51: #{tpu_custom_call.1} parent=47 // pred_region
          %279 = dma.done [#allocation4], 6144
        $region52: #{tpu_custom_call.1} parent=47 // pred_fallthru
          _
        %s280 = smul.u32 8, %s27
        %p281 = scmp.lt.s32.totalorder %s26, 1
        %s282 = scalar_select %p281, %s26, 1
        %p283 = scmp.lt.s32.totalorder %s280, 7
        %s284 = scalar_select %p283, %s280, 7
        %s285 = smul.addr %s282, 8
        %s286 = sadd.s32 %s284, %s285
        %s287 = smul.addr %s286, 4
        %s288 = scalar_lea.vmem %s0, %s287
        %p289 = pneg %p57
        %p290 = pneg %p54
        %p291 = pneg %p78
        %p292 = pneg %p75
        %p293 = pneg %p99
        %p294 = pneg %p96
        %p295 = pneg %p120
        %p296 = pneg %p117
        %p297 = pneg %p141
        %p298 = pneg %p138
        %p299 = pneg %p162
        %p300 = pneg %p159
        %p301 = pneg %p183
        %p302 = pneg %p180
        %p303 = pneg %p209
        %p304 = pneg %p206
        %s305 = sand.u32 %s196, 1
        %s306 = scalar_lea.sflag [#allocation5], %s305
        %s307 = sand.u32 %s196, 1
        %s308 = smul.addr %s307, 3
        %s309 = scalar_lea.vmem [#allocation6], %s308
        %s310 = smul.u32 8, %s27
        %p311 = scmp.lt.s32.totalorder %s26, 1
        %s312 = scalar_select %p311, %s26, 1
        %p313 = scmp.lt.s32.totalorder %s310, 7
        %s314 = scalar_select %p313, %s310, 7
        %s315 = smul.addr %s312, 8
        %s316 = sadd.s32 %s314, %s315
        %s317 = smul.addr %s316, 4
        %s318 = scalar_lea.vmem %s0, %s317
        %s319 = smul.u32 8, %s27
        %p321 = scmp.eq.s32.totalorder %s27, 0
        // Predicated region
        $region53: #{tpu_custom_call.1} parent=47 // pred_check
          %p322 = pneg %p321
        $region54: #{tpu_custom_call.1} parent=47 // pred_check_branch
          %324 = sbr.rel (%p322) target = $region56
        $region55: #{tpu_custom_call.1} parent=47 // pred_region
          %325 = vst [vmem:[#allocation2] sm:$0x1] 0.0
        $region56: #{tpu_custom_call.1} parent=47 // pred_fallthru
          _
        %v326 = vld [vmem:[%s318] sm:$0xf]
        %v327 = vld [vmem:[%s318 + $0x4] sm:$0xf]
        %v328 = vld [vmem:[%s318 + $0x8] sm:$0xf]
        %v329 = vld [vmem:[%s318 + $0xc] sm:$0xf]
        %v330 = vld [vmem:[%s318 + $0x10] sm:$0xf]
        %v331 = vld [vmem:[%s318 + $0x14] sm:$0xf]
        %v332 = vld [vmem:[%s318 + $0x18] sm:$0xf]
        %v333 = vld [vmem:[%s318 + $0x1c] sm:$0xf]
        %v334 = vld [vmem:[%s1] sm:$0xf]
        %v335 = vld [vmem:[%s1 + $0x4] sm:$0xf]
        %v336 = vld [vmem:[%s1 + $0x8] sm:$0xf]
        %v337 = vld [vmem:[%s1 + $0xc] sm:$0xf]
        %v338 = vld [vmem:[%s2] sm:$0x1]
        %v340 = vlaneseq
        %v341 = vshrl.u32 %v340, 7
        %v342 = vsub.s32 0, %v341
        %v343 = vrot.slane %v338, %v342
        %v353 = vunpack.c.l.b16 %v326
        %v354 = vunpack.c.l.b16 %v327
        %v355 = vunpack.c.l.b16 %v328
        %v356 = vunpack.c.l.b16 %v329
        %v357 = vunpack.c.l.b16 %v330
        %v358 = vunpack.c.l.b16 %v331
        %v359 = vunpack.c.l.b16 %v332
        %v360 = vunpack.c.l.b16 %v333
        %v361 = vpack.c.b16 %v354, %v353
        %v362 = vpack.c.b16 %v356, %v355
        %v363 = vpack.c.b16 %v358, %v357
        %v364 = vpack.c.b16 %v360, %v359
        %v369 = vunpack.c.l.b16 %v334
        %v370 = vunpack.c.l.b16 %v335
        %v371 = vunpack.c.l.b16 %v336
        %v372 = vunpack.c.l.b16 %v337
        %v373 = vpack.c.b16 %v370, %v369
        %v374 = vpack.c.b16 %v372, %v371
        %vm377 = vcmask 261120
        %v379 = vsel %vm377, %v361, 0
        %v382 = vsel %vm377, %v362, 0
        %v385 = vsel %vm377, %v363, 0
        %v388 = vsel %vm377, %v364, 0
        %390 = vmatprep.subr.bf16.mxu0 0
        %391 = vmatpush1.bf16.msra.mxu0 0
        %392 = vmatprep.subr.bf16.mxu0 0
        %393 = vmatpush1.bf16.msra.mxu0 0
        %394 = vmatprep.subr.bf16.mxu0 0
        %395 = vmatpush1.bf16.msra.mxu0 0
        %396 = vmatprep.subr.bf16.mxu0 0
        %397 = vmatpush1.bf16.msra.mxu0 0
        %398 = vmatprep.subr.bf16.mxu0 0
        %399 = vmatpush1.bf16.msra.mxu0 0
        %400 = vmatprep.subr.bf16.mxu0 0
        %401 = vmatpush1.bf16.msra.mxu0 0
        %402 = vmatprep.subr.bf16.mxu0 0
        %403 = vmatpush1.bf16.msra.mxu0 %v374
        %404 = vmatprep.subr.bf16.mxu0 0
        %405 = vmatpush1.bf16.msra.mxu0 %v373
        %406 = vmatprep.subr.bf16.mxu0 0
        %407 = vmatpush2.bf16.msra.mxu0 0
        %408 = vmatprep.subr.bf16.mxu0 0
        %409 = vmatpush2.bf16.msra.mxu0 0
        %410 = vmatprep.subr.bf16.mxu0 0
        %411 = vmatpush2.bf16.msra.mxu0 0
        %412 = vmatprep.subr.bf16.mxu0 0
        %413 = vmatpush2.bf16.msra.mxu0 0
        %414 = vmatprep.subr.bf16.mxu0 0
        %415 = vmatpush2.bf16.msra.mxu0 0
        %416 = vmatprep.subr.bf16.mxu0 0
        %417 = vmatpush2.bf16.msra.mxu0 0
        %418 = vmatprep.subr.bf16.mxu0 0
        %419 = vmatpush2.bf16.msra.mxu0 0
        %420 = vmatprep.subr.bf16.mxu0 0
        %421 = vmatpush2.bf16.msra.mxu0 0
        %422 = vmatprep.mubr.bf16.mxu0 0
        %423 = vmatmul.mubr.bf16.gmra.mxu0 %v379
        %v424 = vpop.f32.mrf.mxu0
        %v425 = vadd.f32 %v343, %v424
        %v426 = vpop.f32.mrf.mxu0
        %v427 = vpop.f32.mrf.mxu0
        %v428 = vadd.f32 %v343, %v427
        %v429 = vpop.f32.mrf.mxu0
        %430 = vmatprep.mubr.bf16.mxu0 0
        %431 = vmatmul.mubr.bf16.gmra.mxu0 %v382
        %v432 = vpop.f32.mrf.mxu0
        %v433 = vadd.f32 %v343, %v432
        %v434 = vpop.f32.mrf.mxu0
        %v435 = vpop.f32.mrf.mxu0
        %v436 = vadd.f32 %v343, %v435
        %v437 = vpop.f32.mrf.mxu0
        %438 = vmatprep.mubr.bf16.mxu0 0
        %439 = vmatmul.mubr.bf16.gmra.mxu0 %v385
        %v440 = vpop.f32.mrf.mxu0
        %v441 = vadd.f32 %v343, %v440
        %v442 = vpop.f32.mrf.mxu0
        %v443 = vpop.f32.mrf.mxu0
        %v444 = vadd.f32 %v343, %v443
        %v445 = vpop.f32.mrf.mxu0
        %446 = vmatprep.mubr.bf16.mxu0 0
        %447 = vmatmul.mubr.bf16.gmra.mxu0 %v388
        %v448 = vpop.f32.mrf.mxu0
        %v449 = vadd.f32 %v343, %v448
        %v450 = vpop.f32.mrf.mxu0
        %v451 = vpop.f32.mrf.mxu0
        %v452 = vadd.f32 %v343, %v451
        %v453 = vpop.f32.mrf.mxu0
        %454 = vdwg.mxu0
        %v455 = vsub.f32 0.0, %v425
        %v456 = vsub.f32 0.0, %v428
        %v457 = vsub.f32 0.0, %v433
        %v458 = vsub.f32 0.0, %v436
        %v459 = vsub.f32 0.0, %v441
        %v460 = vsub.f32 0.0, %v444
        %v461 = vsub.f32 0.0, %v449
        %v462 = vsub.f32 0.0, %v452
        %v463 = vmul.f32 %v455, 1.442695
        %v464 = vpow.pop %v463
        %v465 = vmul.f32 %v456, 1.442695
        %v466 = vpow.pop %v465
        %v467 = vmul.f32 %v457, 1.442695
        %v468 = vpow.pop %v467
        %v469 = vmul.f32 %v458, 1.442695
        %v470 = vpow.pop %v469
        %v471 = vmul.f32 %v459, 1.442695
        %v472 = vpow.pop %v471
        %v473 = vmul.f32 %v460, 1.442695
        %v474 = vpow.pop %v473
        %v475 = vmul.f32 %v461, 1.442695
        %v476 = vpow.pop %v475
        %v477 = vmul.f32 %v462, 1.442695
        %v478 = vpow.pop %v477
        %v479 = vadd.f32 %v464, 1.0
        %v480 = vadd.f32 %v466, 1.0
        %v481 = vadd.f32 %v468, 1.0
        %v482 = vadd.f32 %v470, 1.0
        %v483 = vadd.f32 %v472, 1.0
        %v484 = vadd.f32 %v474, 1.0
        %v485 = vadd.f32 %v476, 1.0
        %v486 = vadd.f32 %v478, 1.0
        %v487 = vrcp.pop %v479
        %v488 = vrcp.pop %v480
        %v489 = vrcp.pop %v481
        %v490 = vrcp.pop %v482
        %v491 = vrcp.pop %v483
        %v492 = vrcp.pop %v484
        %v493 = vrcp.pop %v485
        %v494 = vrcp.pop %v486
        %v495 = vmul.f32 %v425, %v487
        %v496 = vmul.f32 %v428, %v488
        %v497 = vmul.f32 %v433, %v489
        %v498 = vmul.f32 %v436, %v490
        %v499 = vmul.f32 %v441, %v491
        %v500 = vmul.f32 %v444, %v492
        %v501 = vmul.f32 %v449, %v493
        %v502 = vmul.f32 %v452, %v494
        %v503 = vpack.c.bf16 %v496, %v495
        %v504 = vpack.c.bf16 %v498, %v497
        %v505 = vpack.c.bf16 %v500, %v499
        %v506 = vpack.c.bf16 %v502, %v501
        %v507 = vld [vmem:[%s3] sm:$0xf]
        %v508 = vld [vmem:[%s3 + $0x4] sm:$0xf]
        %v509 = vld [vmem:[%s3 + $0x8] sm:$0xf]
        %v510 = vld [vmem:[%s3 + $0xc] sm:$0xf]
        %v511 = vld [vmem:[%s4] sm:$0x1]
        %v513 = vlaneseq
        %v514 = vshrl.u32 %v513, 7
        %v515 = vsub.s32 0, %v514
        %v516 = vrot.slane %v511, %v515
        %v522 = vunpack.c.l.b16 %v507
        %v523 = vunpack.c.l.b16 %v508
        %v524 = vunpack.c.l.b16 %v509
        %v525 = vunpack.c.l.b16 %v510
        %v526 = vpack.c.b16 %v523, %v522
        %v527 = vpack.c.b16 %v525, %v524
        %v531 = vsel %vm377, %v503, 0
        %v534 = vsel %vm377, %v504, 0
        %v537 = vsel %vm377, %v505, 0
        %v540 = vsel %vm377, %v506, 0
        %542 = vmatprep.subr.bf16.mxu0 0
        %543 = vmatpush1.bf16.msra.mxu0 0
        %544 = vmatprep.subr.bf16.mxu0 0
        %545 = vmatpush1.bf16.msra.mxu0 0
        %546 = vmatprep.subr.bf16.mxu0 0
        %547 = vmatpush1.bf16.msra.mxu0 0
        %548 = vmatprep.subr.bf16.mxu0 0
        %549 = vmatpush1.bf16.msra.mxu0 0
        %550 = vmatprep.subr.bf16.mxu0 0
        %551 = vmatpush1.bf16.msra.mxu0 0
        %552 = vmatprep.subr.bf16.mxu0 0
        %553 = vmatpush1.bf16.msra.mxu0 0
        %554 = vmatprep.subr.bf16.mxu0 0
        %555 = vmatpush1.bf16.msra.mxu0 %v527
        %556 = vmatprep.subr.bf16.mxu0 0
        %557 = vmatpush1.bf16.msra.mxu0 %v526
        %558 = vmatprep.subr.bf16.mxu0 0
        %559 = vmatpush2.bf16.msra.mxu0 0
        %560 = vmatprep.subr.bf16.mxu0 0
        %561 = vmatpush2.bf16.msra.mxu0 0
        %562 = vmatprep.subr.bf16.mxu0 0
        %563 = vmatpush2.bf16.msra.mxu0 0
        %564 = vmatprep.subr.bf16.mxu0 0
        %565 = vmatpush2.bf16.msra.mxu0 0
        %566 = vmatprep.subr.bf16.mxu0 0
        %567 = vmatpush2.bf16.msra.mxu0 0
        %568 = vmatprep.subr.bf16.mxu0 0
        %569 = vmatpush2.bf16.msra.mxu0 0
        %570 = vmatprep.subr.bf16.mxu0 0
        %571 = vmatpush2.bf16.msra.mxu0 0
        %572 = vmatprep.subr.bf16.mxu0 0
        %573 = vmatpush2.bf16.msra.mxu0 0
        %574 = vmatprep.mubr.bf16.mxu0 0
        %575 = vmatmul.mubr.bf16.gmra.mxu0 %v531
        %v576 = vpop.f32.mrf.mxu0
        %v577 = vadd.f32 %v516, %v576
        %v578 = vpop.f32.mrf.mxu0
        %v579 = vpop.f32.mrf.mxu0
        %v580 = vadd.f32 %v516, %v579
        %v581 = vpop.f32.mrf.mxu0
        %582 = vmatprep.mubr.bf16.mxu0 0
        %583 = vmatmul.mubr.bf16.gmra.mxu0 %v534
        %v584 = vpop.f32.mrf.mxu0
        %v585 = vadd.f32 %v516, %v584
        %v586 = vpop.f32.mrf.mxu0
        %v587 = vpop.f32.mrf.mxu0
        %v588 = vadd.f32 %v516, %v587
        %v589 = vpop.f32.mrf.mxu0
        %590 = vmatprep.mubr.bf16.mxu0 0
        %591 = vmatmul.mubr.bf16.gmra.mxu0 %v537
        %v592 = vpop.f32.mrf.mxu0
        %v593 = vadd.f32 %v516, %v592
        %v594 = vpop.f32.mrf.mxu0
        %v595 = vpop.f32.mrf.mxu0
        %v596 = vadd.f32 %v516, %v595
        %v597 = vpop.f32.mrf.mxu0
        %598 = vmatprep.mubr.bf16.mxu0 0
        %599 = vmatmul.mubr.bf16.gmra.mxu0 %v540
        %v600 = vpop.f32.mrf.mxu0
        %v601 = vadd.f32 %v516, %v600
        %v602 = vpop.f32.mrf.mxu0
        %v603 = vpop.f32.mrf.mxu0
        %v604 = vadd.f32 %v516, %v603
        %v605 = vpop.f32.mrf.mxu0
        %606 = vdwg.mxu0
        %v607 = vsub.f32 0.0, %v577
        %v608 = vsub.f32 0.0, %v580
        %v609 = vsub.f32 0.0, %v585
        %v610 = vsub.f32 0.0, %v588
        %v611 = vsub.f32 0.0, %v593
        %v612 = vsub.f32 0.0, %v596
        %v613 = vsub.f32 0.0, %v601
        %v614 = vsub.f32 0.0, %v604
        %v615 = vmul.f32 %v607, 1.442695
        %v616 = vpow.pop %v615
        %v617 = vmul.f32 %v608, 1.442695
        %v618 = vpow.pop %v617
        %v619 = vmul.f32 %v609, 1.442695
        %v620 = vpow.pop %v619
        %v621 = vmul.f32 %v610, 1.442695
        %v622 = vpow.pop %v621
        %v623 = vmul.f32 %v611, 1.442695
        %v624 = vpow.pop %v623
        %v625 = vmul.f32 %v612, 1.442695
        %v626 = vpow.pop %v625
        %v627 = vmul.f32 %v613, 1.442695
        %v628 = vpow.pop %v627
        %v629 = vmul.f32 %v614, 1.442695
        %v630 = vpow.pop %v629
        %v631 = vadd.f32 %v616, 1.0
        %v632 = vadd.f32 %v618, 1.0
        %v633 = vadd.f32 %v620, 1.0
        %v634 = vadd.f32 %v622, 1.0
        %v635 = vadd.f32 %v624, 1.0
        %v636 = vadd.f32 %v626, 1.0
        %v637 = vadd.f32 %v628, 1.0
        %v638 = vadd.f32 %v630, 1.0
        %v639 = vrcp.pop %v631
        %v640 = vrcp.pop %v632
        %v641 = vrcp.pop %v633
        %v642 = vrcp.pop %v634
        %v643 = vrcp.pop %v635
        %v644 = vrcp.pop %v636
        %v645 = vrcp.pop %v637
        %v646 = vrcp.pop %v638
        %v647 = vmul.f32 %v577, %v639
        %v648 = vmul.f32 %v580, %v640
        %v649 = vmul.f32 %v585, %v641
        %v650 = vmul.f32 %v588, %v642
        %v651 = vmul.f32 %v593, %v643
        %v652 = vmul.f32 %v596, %v644
        %v653 = vmul.f32 %v601, %v645
        %v654 = vmul.f32 %v604, %v646
        %v655 = vld [vmem:[#allocation2] sm:$0x1]
        %v656 = vadd.f32 %v647, %v648
        %v657 = vadd.f32 %v656, %v649
        %v658 = vadd.f32 %v657, %v650
        %v659 = vadd.f32 %v658, %v651
        %v660 = vadd.f32 %v659, %v652
        %v661 = vadd.f32 %v660, %v653
        %v662 = vadd.f32 %v661, %v654
        %v663 = vrot.slane %v662, 4
        %v664 = vadd.f32 %v662, %v663
        %v665 = vrot.slane %v664, 2
        %v666 = vadd.f32 %v664, %v665
        %v667 = vrot.slane %v666, 1
        %v668 = vadd.f32 %v666, %v667
        %v669 = vadd.f32 %v655, %v668
        %670 = vst [vmem:[#allocation2] sm:$0x1] %v669
        // Predicated region
        $region57: #{tpu_custom_call.1} parent=47 // pred_check
          %p671 = pneg %p321
        $region58: #{tpu_custom_call.1} parent=47 // pred_check_branch
          %673 = sbr.rel (%p671) target = $region60
        $region59: #{tpu_custom_call.1} parent=47 // pred_region
          %v674 = vld [vmem:[#allocation2] sm:$0x1]
          %v675 = vmul.f32 %v674, 0.015625
          %v676 = vld [vmem:[#allocation3] sm:$0xff]
          %v677 = vld [vmem:[#allocation3 + $0x8] sm:$0xff]
          %v678 = vld [vmem:[#allocation3 + $0x10] sm:$0xff]
          %v679 = vld [vmem:[#allocation3 + $0x18] sm:$0xff]
          %v680 = vld [vmem:[#allocation3 + $0x20] sm:$0xff]
          %v681 = vld [vmem:[#allocation3 + $0x28] sm:$0xff]
          %v682 = vld [vmem:[#allocation3 + $0x30] sm:$0xff]
          %v683 = vld [vmem:[#allocation3 + $0x38] sm:$0xff]
          %v684 = vld [vmem:[#allocation3 + $0x40] sm:$0xff]
          %v685 = vld [vmem:[#allocation3 + $0x48] sm:$0xff]
          %v686 = vld [vmem:[#allocation3 + $0x50] sm:$0xff]
          %v687 = vld [vmem:[#allocation3 + $0x58] sm:$0xff]
          %v688 = vld [vmem:[#allocation3 + $0x60] sm:$0xff]
          %v689 = vld [vmem:[#allocation3 + $0x68] sm:$0xff]
          %v690 = vld [vmem:[#allocation3 + $0x70] sm:$0xff]
          %v691 = vld [vmem:[#allocation3 + $0x78] sm:$0xff]
          %v692 = vld [vmem:[#allocation3 + $0x80] sm:$0xff]
          %v693 = vld [vmem:[#allocation3 + $0x88] sm:$0xff]
          %v694 = vld [vmem:[#allocation3 + $0x90] sm:$0xff]
          %v695 = vld [vmem:[#allocation3 + $0x98] sm:$0xff]
          %v696 = vld [vmem:[#allocation3 + $0xa0] sm:$0xff]
          %v697 = vld [vmem:[#allocation3 + $0xa8] sm:$0xff]
          %v698 = vld [vmem:[#allocation3 + $0xb0] sm:$0xff]
          %v699 = vld [vmem:[#allocation3 + $0xb8] sm:$0xff]
          %v700 = vld [vmem:[#allocation3 + $0xc0] sm:$0xff]
          %v701 = vld [vmem:[#allocation3 + $0xc8] sm:$0xff]
          %v702 = vld [vmem:[#allocation3 + $0xd0] sm:$0xff]
          %v703 = vld [vmem:[#allocation3 + $0xd8] sm:$0xff]
          %v704 = vld [vmem:[#allocation3 + $0xe0] sm:$0xff]
          %v705 = vld [vmem:[#allocation3 + $0xe8] sm:$0xff]
          %v706 = vld [vmem:[#allocation3 + $0xf0] sm:$0xff]
          %v707 = vld [vmem:[#allocation3 + $0xf8] sm:$0xff]
          %v708 = vld [vmem:[#allocation3 + $0x100] sm:$0xff]
          %v709 = vld [vmem:[#allocation3 + $0x108] sm:$0xff]
          %v710 = vld [vmem:[#allocation3 + $0x110] sm:$0xff]
          %v711 = vld [vmem:[#allocation3 + $0x118] sm:$0xff]
          %v712 = vld [vmem:[#allocation3 + $0x120] sm:$0xff]
          %v713 = vld [vmem:[#allocation3 + $0x128] sm:$0xff]
          %v714 = vld [vmem:[#allocation3 + $0x130] sm:$0xff]
          %v715 = vld [vmem:[#allocation3 + $0x138] sm:$0xff]
          %v716 = vld [vmem:[#allocation3 + $0x140] sm:$0xff]
          %v717 = vld [vmem:[#allocation3 + $0x148] sm:$0xff]
          %v718 = vld [vmem:[#allocation3 + $0x150] sm:$0xff]
          %v719 = vld [vmem:[#allocation3 + $0x158] sm:$0xff]
          %v720 = vld [vmem:[#allocation3 + $0x160] sm:$0xff]
          %v721 = vld [vmem:[#allocation3 + $0x168] sm:$0xff]
          %v722 = vld [vmem:[#allocation3 + $0x170] sm:$0xff]
          %v723 = vld [vmem:[#allocation3 + $0x178] sm:$0xff]
          %v724 = vld [vmem:[%s6] sm:$0x7]
          %v726 = vlaneseq
          %v727 = vshrl.u32 %v726, 7
          %v728 = vsub.s32 0, %v727
          %v729 = vrot.slane %v724, %v728
          %v730 = vlaneseq
          %v731 = vshrl.u32 %v730, 7
          %v732 = vsub.s32 1, %v731
          %v733 = vrot.slane %v724, %v732
          %v734 = vlaneseq
          %v735 = vshrl.u32 %v734, 7
          %v736 = vsub.s32 2, %v735
          %v737 = vrot.slane %v724, %v736
          %741 = vmatprep.subr.mxu0 %v722
          %742 = vmatpush1.msra.mxu0 %v721
          %743 = vmatprep.subr.mxu0 %v719
          %744 = vmatpush1.msra.mxu0 %v718
          %745 = vmatprep.subr.mxu0 %v716
          %746 = vmatpush1.msra.mxu0 %v715
          %747 = vmatprep.subr.mxu0 %v713
          %748 = vmatpush1.msra.mxu0 %v712
          %749 = vmatprep.subr.mxu0 %v710
          %750 = vmatpush1.msra.mxu0 %v709
          %751 = vmatprep.subr.mxu0 %v707
          %752 = vmatpush1.msra.mxu0 %v706
          %753 = vmatprep.subr.mxu0 %v704
          %754 = vmatpush1.msra.mxu0 %v703
          %755 = vmatprep.subr.mxu0 %v701
          %756 = vmatpush1.msra.mxu0 %v700
          %757 = vmatprep.subr.mxu0 %v698
          %758 = vmatpush1.msra.mxu0 %v697
          %759 = vmatprep.subr.mxu0 %v695
          %760 = vmatpush1.msra.mxu0 %v694
          %761 = vmatprep.subr.mxu0 %v692
          %762 = vmatpush1.msra.mxu0 %v691
          %763 = vmatprep.subr.mxu0 %v689
          %764 = vmatpush1.msra.mxu0 %v688
          %765 = vmatprep.subr.mxu0 %v686
          %766 = vmatpush1.msra.mxu0 %v685
          %767 = vmatprep.subr.mxu0 %v683
          %768 = vmatpush1.msra.mxu0 %v682
          %769 = vmatprep.subr.mxu0 %v680
          %770 = vmatpush1.msra.mxu0 %v679
          %771 = vmatprep.subr.mxu0 %v677
          %772 = vmatpush1.msra.mxu0 %v676
          %773 = vmatprep.subr.mxu0 0.0
          %774 = vmatpush2.msra.mxu0 0.0
          %775 = vmatprep.subr.mxu0 0.0
          %776 = vmatpush2.msra.mxu0 0.0
          %777 = vmatprep.subr.mxu0 0.0
          %778 = vmatpush2.msra.mxu0 0.0
          %779 = vmatprep.subr.mxu0 0.0
          %780 = vmatpush2.msra.mxu0 0.0
          %781 = vmatprep.subr.mxu0 0.0
          %782 = vmatpush2.msra.mxu0 0.0
          %783 = vmatprep.subr.mxu0 0.0
          %784 = vmatpush2.msra.mxu0 0.0
          %785 = vmatprep.subr.mxu0 0.0
          %786 = vmatpush2.msra.mxu0 0.0
          %787 = vmatprep.subr.mxu0 0.0
          %788 = vmatpush2.msra.mxu0 0.0
          %789 = vmatprep.subr.mxu0 0.0
          %790 = vmatpush2.msra.mxu0 0.0
          %791 = vmatprep.subr.mxu0 0.0
          %792 = vmatpush2.msra.mxu0 0.0
          %793 = vmatprep.subr.mxu0 0.0
          %794 = vmatpush2.msra.mxu0 0.0
          %795 = vmatprep.subr.mxu0 0.0
          %796 = vmatpush2.msra.mxu0 0.0
          %797 = vmatprep.subr.mxu0 0.0
          %798 = vmatpush2.msra.mxu0 0.0
          %799 = vmatprep.subr.mxu0 0.0
          %800 = vmatpush2.msra.mxu0 0.0
          %801 = vmatprep.subr.mxu0 0.0
          %802 = vmatpush2.msra.mxu0 0.0
          %803 = vmatprep.subr.mxu0 0.0
          %804 = vmatpush2.msra.mxu0 0.0
          %805 = vmatprep.mubr.f32.mxu0 0.0
          %806 = vmatmul.mubr.f32.gmra.mxu0 %v675
          %v807 = vpop.f32.mrf.mxu0
          %v808 = vadd.f32 %v729, %v807
          %v809 = vpop.f32.mrf.mxu0
          %v810 = vadd.f32 %v733, %v809
          %811 = vdwg.mxu0
          %812 = vmatprep.subr.mxu0 0.0
          %813 = vmatpush1.msra.mxu0 %v723
          %814 = vmatprep.subr.mxu0 0.0
          %815 = vmatpush1.msra.mxu0 %v720
          %816 = vmatprep.subr.mxu0 0.0
          %817 = vmatpush1.msra.mxu0 %v717
          %818 = vmatprep.subr.mxu0 0.0
          %819 = vmatpush1.msra.mxu0 %v714
          %820 = vmatprep.subr.mxu0 0.0
          %821 = vmatpush1.msra.mxu0 %v711
          %822 = vmatprep.subr.mxu0 0.0
          %823 = vmatpush1.msra.mxu0 %v708
          %824 = vmatprep.subr.mxu0 0.0
          %825 = vmatpush1.msra.mxu0 %v705
          %826 = vmatprep.subr.mxu0 0.0
          %827 = vmatpush1.msra.mxu0 %v702
          %828 = vmatprep.subr.mxu0 0.0
          %829 = vmatpush1.msra.mxu0 %v699
          %830 = vmatprep.subr.mxu0 0.0
          %831 = vmatpush1.msra.mxu0 %v696
          %832 = vmatprep.subr.mxu0 0.0
          %833 = vmatpush1.msra.mxu0 %v693
          %834 = vmatprep.subr.mxu0 0.0
          %835 = vmatpush1.msra.mxu0 %v690
          %836 = vmatprep.subr.mxu0 0.0
          %837 = vmatpush1.msra.mxu0 %v687
          %838 = vmatprep.subr.mxu0 0.0
          %839 = vmatpush1.msra.mxu0 %v684
          %840 = vmatprep.subr.mxu0 0.0
          %841 = vmatpush1.msra.mxu0 %v681
          %842 = vmatprep.subr.mxu0 0.0
          %843 = vmatpush1.msra.mxu0 %v678
          %844 = vmatprep.subr.mxu0 0.0
          %845 = vmatpush2.msra.mxu0 0.0
          %846 = vmatprep.subr.mxu0 0.0
          %847 = vmatpush2.msra.mxu0 0.0
          %848 = vmatprep.subr.mxu0 0.0
          %849 = vmatpush2.msra.mxu0 0.0
          %850 = vmatprep.subr.mxu0 0.0
          %851 = vmatpush2.msra.mxu0 0.0
          %852 = vmatprep.subr.mxu0 0.0
          %853 = vmatpush2.msra.mxu0 0.0
          %854 = vmatprep.subr.mxu0 0.0
          %855 = vmatpush2.msra.mxu0 0.0
          %856 = vmatprep.subr.mxu0 0.0
          %857 = vmatpush2.msra.mxu0 0.0
          %858 = vmatprep.subr.mxu0 0.0
          %859 = vmatpush2.msra.mxu0 0.0
          %860 = vmatprep.subr.mxu0 0.0
          %861 = vmatpush2.msra.mxu0 0.0
          %862 = vmatprep.subr.mxu0 0.0
          %863 = vmatpush2.msra.mxu0 0.0
          %864 = vmatprep.subr.mxu0 0.0
          %865 = vmatpush2.msra.mxu0 0.0
          %866 = vmatprep.subr.mxu0 0.0
          %867 = vmatpush2.msra.mxu0 0.0
          %868 = vmatprep.subr.mxu0 0.0
          %869 = vmatpush2.msra.mxu0 0.0
          %870 = vmatprep.subr.mxu0 0.0
          %871 = vmatpush2.msra.mxu0 0.0
          %872 = vmatprep.subr.mxu0 0.0
          %873 = vmatpush2.msra.mxu0 0.0
          %874 = vmatprep.subr.mxu0 0.0
          %875 = vmatpush2.msra.mxu0 0.0
          %876 = vmatprep.mubr.f32.mxu0 0.0
          %877 = vmatmul.mubr.f32.gmra.mxu0 %v675
          %v878 = vpop.f32.mrf.mxu0
          %v879 = vadd.f32 %v737, %v878
          %v880 = vpop.f32.mrf.mxu0
          %881 = vdwg.mxu0
          %v885 = vcombine.low %v808, %v810
          %v887 = vunpack.c.l.s4 1966171168
          %v888 = vunpack.c.0.s8 %v887
          %v889 = vlaneseq
          %v890 = vshrl.u32 %v889, 7
          %v891 = vsub.s32 %v888, %v890
          %v892 = vrot.slane %v885, %v891
          %v894 = vunpack.c.l.s4 1966171168
          %v895 = vunpack.c.0.s8 %v894
          %v896 = vlaneseq
          %v897 = vshrl.u32 %v896, 7
          %v898 = vsub.s32 %v895, %v897
          %v899 = vrot.slane %v879, %v898
          %v900 = vcombine.low %v892, %v899
          %v902 = vunpack.c.l.s4 1966171168
          %v903 = vunpack.c.0.s8 %v902
          %v904 = vlaneseq
          %v905 = vshrl.u32 %v904, 7
          %v906 = vsub.s32 %v903, %v905
          %v907 = vrot.slane %v900, %v906
          %v909 = vlaneseq
          %vm910 = vcmp.ge.s32.totalorder %v909, 0
          %vm911 = vcmp.lt.s32.totalorder %v909, 384
          %vm912 = vmand %vm910, %vm911
          %913 = vst.msk [vmem:[%s309] sm:$0x7] %vm912, %v907
        $region60: #{tpu_custom_call.1} parent=47 // pred_fallthru
          _
        %s914 = sand.u32 %s196, 1
        %s915 = scalar_lea.sflag [#allocation5], %s914
        %s916 = sand.u32 %s196, 1
        %s917 = smul.addr %s916, 3
        %s918 = scalar_lea.vmem [#allocation6], %s917
        // Predicated region
        $region61: #{tpu_custom_call.1} parent=47 // pred_check
          %p919 = pneg %p206
        $region62: #{tpu_custom_call.1} parent=47 // pred_check_branch
          %921 = sbr.rel (%p919) target = $region64
        $region63: #{tpu_custom_call.1} parent=47 // pred_region
          %s923 = ssub.s32 48, 48
          %924 = vsyncadd %s915, %s923
          %s925 = smul.addr %s26, 3
          %s926 = smul.addr %s925, 16
          %s927 = scalar_lea.hbm %s7, %s926
          %s929 = sshll.u32 %s918, 4
          %s930 = int_to_ptr.vmem [resolvable:$true] %s929
          %932 = dma.vmem_to_hbm [thread:$0]  %s930, 48, %s927, %s915
        $region64: #{tpu_custom_call.1} parent=47 // pred_fallthru
          _
      $region48: #{tpu_custom_call.1} parent=5 // pred_fallthru
        _
      %p933 = scmp.le.s32.totalorder 2, %s17
      // Predicated region
      $region65: #{tpu_custom_call.1} parent=5 // pred_check
        %p934 = pneg %p933
      $region66: #{tpu_custom_call.1} parent=5 // pred_check_branch
        %936 = sbr.rel (%p934) target = $region68
      $region67: #{tpu_custom_call.1} parent=5 // pred_region
        %s937 = ssub.s32 %s17, 2
        // Predicated region
        $region69: #{tpu_custom_call.1} parent=67 // pred_check
          %p938 = pneg %p212
        $region70: #{tpu_custom_call.1} parent=67 // pred_check_branch
          %940 = sbr.rel (%p938) target = $region72
        $region71: #{tpu_custom_call.1} parent=67 // pred_region
          %s941 = sand.u32 %s197, 1
          %s942 = scalar_lea.sflag [#allocation5], %s941
          %s943 = sand.u32 %s197, 1
          %s944 = smul.addr %s943, 3
          %s945 = scalar_lea.vmem [#allocation6], %s944
          %946 = dma.done %s942, 48
        $region72: #{tpu_custom_call.1} parent=67 // pred_fallthru
          _
      $region68: #{tpu_custom_call.1} parent=5 // pred_fallthru
        _
    $region6: #{tpu_custom_call.1} parent=1 // loop_footer
      %s21 = sadd.s32 1, %s17
    $region7: #{tpu_custom_call.1} parent=1 // loop_footer_branch
      %16 = sbr.rel target = $region3
    $region8: #{tpu_custom_call.1} parent=1 // loop_exit
      _
    %947 = vsyncpa [#allocation4], 1
    %s948 = scalar_lea.sflag [#allocation4], 1
    %949 = vsyncpa %s948, 1
    %950 = vsyncpa [#allocation5], 1
    %s951 = scalar_lea.sflag [#allocation5], 1
    %952 = vsyncpa %s951, 1

</llo_original>
